<compile_context>
chip_gen: v6e
topology: v6e:2x2x1
jax: 0.10.0
libtpu: 0.0.40
codegen_flags: <defaults>
</compile_context>

<pallas_src>
import functools

import jax
import jax.numpy as jnp
import numpy as np
from jax.experimental import pallas as pl
from jax.experimental.pallas import tpu as pltpu


def _dense_block_kernel(x_ref, w_ref, mask_ref, b_ref, alpha_ref, out_ref, *,
                        img_w):
    """Single invocation (no grid); everything resident in VMEM.

    x_ref    : (N, Cin, H*W)      f32   input, NCHW with spatial flattened
    w_ref    : (Cout, 9*Cin)      bf16  conv weights, tap-major rows
    mask_ref : (9, N*H*W)         f32   0/1 edge masks per tap
    b_ref    : (Cout, 1)          f32   bias
    alpha_ref: (1,)               f32   PReLU slope (SMEM scalar)
    out_ref  : (N, Cin+Cout, H*W) f32   fused concat((x, prelu(conv)), channel)
    """
    N, Cin, HW = x_ref.shape
    L = N * HW
    pad = img_w + 1                      # max |tap shift| = W + 1

    x = x_ref[...]                                        # (N, Cin, HW) f32
    # Fold batch onto the lane axis -> (Cin, N*HW); 256-lane pieces, aligned.
    x_all = jnp.concatenate([x[n] for n in range(N)], axis=-1)
    # Lane-pad so every tap window is an in-bounds *static* lane slice.
    zpad = jnp.zeros((Cin, pad), jnp.float32)
    x_ext = jnp.concatenate([zpad, x_all, zpad], axis=-1)  # (Cin, L + 2*pad)

    m_all = mask_ref[...]                                 # (9, L) 0/1 f32

    # Build the im2col patch matrix (9*Cin, L): for tap (kh, kw) the needed
    # value at flat position p is x_all[:, p + (kh-1)*W + (kw-1)] when the
    # shifted pixel stays inside the same image, else 0 (zero padding).
    taps = []
    for kh in range(3):
        for kw in range(3):
            t = kh * 3 + kw
            s = (kh - 1) * img_w + (kw - 1)               # flat-index shift
            win = x_ext[:, pad + s:pad + s + L]           # (Cin, L) lane window
            taps.append(win * m_all[t:t + 1, :])          # mask out-of-image taps
    patches = jnp.concatenate(taps, axis=0)               # (9*Cin, L) f32

    # One fused MXU contraction: bf16 operands, f32 accumulation.
    acc = jnp.dot(w_ref[...], patches.astype(jnp.bfloat16),
                  preferred_element_type=jnp.float32)     # (Cout, L)
    acc = acc + b_ref[...]                                # bias broadcast
    alpha = alpha_ref[0]                                  # SMEM scalar
    acc = jnp.where(acc > 0, acc, alpha * acc)            # PReLU

    # Fused torch.cat((x, out), 1): lane-dense (Cin+Cout, HW) store per image.
    for n in range(N):
        out_ref[n] = jnp.concatenate(
            [x[n], acc[:, n * HW:(n + 1) * HW]], axis=0)


@jax.jit
def dense_block_rdn(x_nchw, w_oihw, bias, alpha):
    """x_nchw: (N, Cin, H, W) f32 -> (N, Cin+Cout, H, W) f32."""
    N, Cin, H, W = x_nchw.shape
    Cout = w_oihw.shape[0]
    HW = H * W
    L = N * HW

    # ---- wrapper glue: free reshapes + tiny static parameter prep ----------
    x_flat = x_nchw.reshape(N, Cin, HW)                        # free reshape
    # (Cout, Cin, 3, 3) -> (Cout, kh, kw, Cin) -> (Cout, 9*Cin), bf16 for MXU.
    w2d = jnp.transpose(w_oihw, (0, 2, 3, 1)).reshape(Cout, 9 * Cin)
    w2d = w2d.astype(jnp.bfloat16)
    b_col = bias.astype(jnp.float32).reshape(Cout, 1)
    a_sc = jnp.asarray(alpha, jnp.float32).reshape(1)

    # Static 0/1 edge masks for the 9 taps (trace-time numpy -> XLA constant).
    q = np.arange(L) % HW
    hh, ww = q // W, q % W
    m = []
    for kh in range(3):
        for kw in range(3):
            dh, dw = kh - 1, kw - 1
            m.append((hh + dh >= 0) & (hh + dh < H)
                     & (ww + dw >= 0) & (ww + dw < W))
    mask = jnp.asarray(np.stack(m, axis=0).astype(np.float32))  # (9, L)

    # ---- Pallas: fused conv3x3 + bias + PReLU + channel concat --------------
    out_flat = pl.pallas_call(
        functools.partial(_dense_block_kernel, img_w=W),
        out_shape=jax.ShapeDtypeStruct((N, Cin + Cout, HW), jnp.float32),
        in_specs=[
            pl.BlockSpec(memory_space=pltpu.MemorySpace.VMEM),   # x
            pl.BlockSpec(memory_space=pltpu.MemorySpace.VMEM),   # w2d (bf16)
            pl.BlockSpec(memory_space=pltpu.MemorySpace.VMEM),   # edge masks
            pl.BlockSpec(memory_space=pltpu.MemorySpace.VMEM),   # bias
            pl.BlockSpec(memory_space=pltpu.MemorySpace.SMEM),   # alpha scalar
        ],
        out_specs=pl.BlockSpec(memory_space=pltpu.MemorySpace.VMEM),
    )(x_flat, w2d, mask, b_col, a_sc)

    return out_flat.reshape(N, Cin + Cout, H, W)               # free reshape


def _reference(x_nchw, w_oihw, bias, alpha):
    """Pure-JAX reference (same bf16-operand / f32-accumulate contraction)."""
    y = jax.lax.conv_general_dilated(
        x_nchw.astype(jnp.bfloat16), w_oihw.astype(jnp.bfloat16),
        window_strides=(1, 1), padding=((1, 1), (1, 1)),
        dimension_numbers=("NCHW", "OIHW", "NCHW"),
        preferred_element_type=jnp.float32)
    y = y + bias.reshape(1, -1, 1, 1)
    y = jnp.where(y > 0, y, alpha * y)
    return jnp.concatenate([x_nchw, y], axis=1)


if __name__ == "__main__":
    # Small shapes consistent with the module: in_filter=4, out_filter=8.
    N, Cin, Cout, H, W = 2, 4, 8, 16, 16

    key = jax.random.PRNGKey(0)
    kx, kw, kb = jax.random.split(key, 3)
    x = jax.random.normal(kx, (N, Cin, H, W), jnp.float32)
    # Deterministic parameter init (Conv2d weight OIHW, bias, PReLU slope 0.25).
    fan_in = Cin * 3 * 3
    bound = 1.0 / np.sqrt(fan_in)
    w = jax.random.uniform(kw, (Cout, Cin, 3, 3), jnp.float32, -bound, bound)
    b = jax.random.uniform(kb, (Cout,), jnp.float32, -bound, bound)
    alpha = jnp.float32(0.25)

    out = jax.block_until_ready(dense_block_rdn(x, w, b, alpha))
    ref = jax.block_until_ready(_reference(x, w, b, alpha))

    assert out.shape == (N, Cin + Cout, H, W), out.shape
    np.testing.assert_allclose(np.asarray(out), np.asarray(ref),
                               rtol=1e-2, atol=1e-2)
    print("KERNEL_OK")
</pallas_src>

<mosaic_0001>
module attributes {stable_mosaic.version = 11 : i64} {
  func.func @_dense_block_kernel(%arg0: memref<2x4x256xf32, #tpu.memory_space<vmem>>, %arg1: memref<8x36xbf16, #tpu.memory_space<vmem>>, %arg2: memref<9x512xf32, #tpu.memory_space<vmem>>, %arg3: memref<8x1xf32, #tpu.memory_space<vmem>>, %arg4: memref<1xf32, #tpu.memory_space<smem>>, %arg5: memref<2x12x256xf32, #tpu.memory_space<vmem>>) attributes {dimension_semantics = [], scalar_prefetch = 0 : i64, scratch_operands = 0 : i64, tpu.core_type = #tpu.core_type<tc>} {
    %c0 = arith.constant 0 : index
    %c0_0 = arith.constant 0 : index
    %c0_1 = arith.constant 0 : index
    %0 = vector.load %arg0[%c0, %c0_0, %c0_1] : memref<2x4x256xf32, #tpu.memory_space<vmem>>, vector<2x4x256xf32>
    %1 = vector.extract_strided_slice %0 {offsets = [0, 0, 0], sizes = [1, 4, 256], strides = [1, 1, 1]} : vector<2x4x256xf32> to vector<1x4x256xf32>
    %2 = vector.shape_cast %1 : vector<1x4x256xf32> to vector<4x256xf32>
    %3 = vector.extract_strided_slice %0 {offsets = [1, 0, 0], sizes = [1, 4, 256], strides = [1, 1, 1]} : vector<2x4x256xf32> to vector<1x4x256xf32>
    %4 = vector.shape_cast %3 : vector<1x4x256xf32> to vector<4x256xf32>
    %5 = tpu.concatenate %2, %4 in 1 : vector<4x256xf32>, vector<4x256xf32> -> vector<4x512xf32>
    %cst = arith.constant 0.000000e+00 : f32
    %6 = vector.broadcast %cst : f32 to vector<4x17xf32>
    %7 = tpu.concatenate %6, %5, %6 in 1 : vector<4x17xf32>, vector<4x512xf32>, vector<4x17xf32> -> vector<4x546xf32>
    %c0_2 = arith.constant 0 : index
    %c0_3 = arith.constant 0 : index
    %8 = vector.load %arg2[%c0_2, %c0_3] : memref<9x512xf32, #tpu.memory_space<vmem>>, vector<9x512xf32>
    %9 = vector.extract_strided_slice %7 {offsets = [0, 0], sizes = [4, 512], strides = [1, 1]} : vector<4x546xf32> to vector<4x512xf32>
    %10 = vector.extract_strided_slice %8 {offsets = [0, 0], sizes = [1, 512], strides = [1, 1]} : vector<9x512xf32> to vector<1x512xf32>
    %11 = vector.broadcast %10 : vector<1x512xf32> to vector<4x512xf32>
    %12 = arith.mulf %9, %11 : vector<4x512xf32>
    %13 = vector.extract_strided_slice %7 {offsets = [0, 1], sizes = [4, 512], strides = [1, 1]} : vector<4x546xf32> to vector<4x512xf32>
    %14 = vector.extract_strided_slice %8 {offsets = [1, 0], sizes = [1, 512], strides = [1, 1]} : vector<9x512xf32> to vector<1x512xf32>
    %15 = vector.broadcast %14 : vector<1x512xf32> to vector<4x512xf32>
    %16 = arith.mulf %13, %15 : vector<4x512xf32>
    %17 = vector.extract_strided_slice %7 {offsets = [0, 2], sizes = [4, 512], strides = [1, 1]} : vector<4x546xf32> to vector<4x512xf32>
    %18 = vector.extract_strided_slice %8 {offsets = [2, 0], sizes = [1, 512], strides = [1, 1]} : vector<9x512xf32> to vector<1x512xf32>
    %19 = vector.broadcast %18 : vector<1x512xf32> to vector<4x512xf32>
    %20 = arith.mulf %17, %19 : vector<4x512xf32>
    %21 = vector.extract_strided_slice %7 {offsets = [0, 16], sizes = [4, 512], strides = [1, 1]} : vector<4x546xf32> to vector<4x512xf32>
    %22 = vector.extract_strided_slice %8 {offsets = [3, 0], sizes = [1, 512], strides = [1, 1]} : vector<9x512xf32> to vector<1x512xf32>
    %23 = vector.broadcast %22 : vector<1x512xf32> to vector<4x512xf32>
    %24 = arith.mulf %21, %23 : vector<4x512xf32>
    %25 = vector.extract_strided_slice %7 {offsets = [0, 17], sizes = [4, 512], strides = [1, 1]} : vector<4x546xf32> to vector<4x512xf32>
    %26 = vector.extract_strided_slice %8 {offsets = [4, 0], sizes = [1, 512], strides = [1, 1]} : vector<9x512xf32> to vector<1x512xf32>
    %27 = vector.broadcast %26 : vector<1x512xf32> to vector<4x512xf32>
    %28 = arith.mulf %25, %27 : vector<4x512xf32>
    %29 = vector.extract_strided_slice %7 {offsets = [0, 18], sizes = [4, 512], strides = [1, 1]} : vector<4x546xf32> to vector<4x512xf32>
    %30 = vector.extract_strided_slice %8 {offsets = [5, 0], sizes = [1, 512], strides = [1, 1]} : vector<9x512xf32> to vector<1x512xf32>
    %31 = vector.broadcast %30 : vector<1x512xf32> to vector<4x512xf32>
    %32 = arith.mulf %29, %31 : vector<4x512xf32>
    %33 = vector.extract_strided_slice %7 {offsets = [0, 32], sizes = [4, 512], strides = [1, 1]} : vector<4x546xf32> to vector<4x512xf32>
    %34 = vector.extract_strided_slice %8 {offsets = [6, 0], sizes = [1, 512], strides = [1, 1]} : vector<9x512xf32> to vector<1x512xf32>
    %35 = vector.broadcast %34 : vector<1x512xf32> to vector<4x512xf32>
    %36 = arith.mulf %33, %35 : vector<4x512xf32>
    %37 = vector.extract_strided_slice %7 {offsets = [0, 33], sizes = [4, 512], strides = [1, 1]} : vector<4x546xf32> to vector<4x512xf32>
    %38 = vector.extract_strided_slice %8 {offsets = [7, 0], sizes = [1, 512], strides = [1, 1]} : vector<9x512xf32> to vector<1x512xf32>
    %39 = vector.broadcast %38 : vector<1x512xf32> to vector<4x512xf32>
    %40 = arith.mulf %37, %39 : vector<4x512xf32>
    %41 = vector.extract_strided_slice %7 {offsets = [0, 34], sizes = [4, 512], strides = [1, 1]} : vector<4x546xf32> to vector<4x512xf32>
    %42 = vector.extract_strided_slice %8 {offsets = [8, 0], sizes = [1, 512], strides = [1, 1]} : vector<9x512xf32> to vector<1x512xf32>
    %43 = vector.broadcast %42 : vector<1x512xf32> to vector<4x512xf32>
    %44 = arith.mulf %41, %43 : vector<4x512xf32>
    %45 = tpu.concatenate %12, %16, %20, %24, %28, %32, %36, %40, %44 in 0 : vector<4x512xf32>, vector<4x512xf32>, vector<4x512xf32>, vector<4x512xf32>, vector<4x512xf32>, vector<4x512xf32>, vector<4x512xf32>, vector<4x512xf32>, vector<4x512xf32> -> vector<36x512xf32>
    %c0_4 = arith.constant 0 : index
    %c0_5 = arith.constant 0 : index
    %46 = vector.load %arg1[%c0_4, %c0_5] : memref<8x36xbf16, #tpu.memory_space<vmem>>, vector<8x36xbf16>
    %47 = arith.truncf %45 : vector<36x512xf32> to vector<36x512xbf16>
    %cst_6 = arith.constant dense<0.000000e+00> : vector<8x512xf32>
    %48 = tpu.matmul %46, %47, %cst_6 {dimension_numbers = #tpu.dot_dimension_numbers<[1], [0], [0], [1], [0, 0, 1, 1], [], []>} : vector<8x36xbf16>, vector<36x512xbf16>, vector<8x512xf32> -> vector<8x512xf32>
    %c0_7 = arith.constant 0 : index
    %c0_8 = arith.constant 0 : index
    %49 = vector.load %arg3[%c0_7, %c0_8] : memref<8x1xf32, #tpu.memory_space<vmem>>, vector<8x1xf32>
    %50 = vector.broadcast %49 : vector<8x1xf32> to vector<8x512xf32>
    %51 = arith.addf %48, %50 : vector<8x512xf32>
    %c0_9 = arith.constant 0 : index
    %52 = memref.load %arg4[%c0_9] : memref<1xf32, #tpu.memory_space<smem>>
    %cst_10 = arith.constant 0.000000e+00 : f32
    %53 = vector.broadcast %cst_10 : f32 to vector<8x512xf32>
    %54 = arith.cmpf ogt, %51, %53 : vector<8x512xf32>
    %55 = vector.broadcast %52 : f32 to vector<8x512xf32>
    %56 = arith.mulf %55, %51 : vector<8x512xf32>
    %57 = arith.select %54, %51, %56 : vector<8x512xi1>, vector<8x512xf32>
    %58 = vector.extract_strided_slice %0 {offsets = [0, 0, 0], sizes = [1, 4, 256], strides = [1, 1, 1]} : vector<2x4x256xf32> to vector<1x4x256xf32>
    %59 = vector.shape_cast %58 : vector<1x4x256xf32> to vector<4x256xf32>
    %60 = vector.extract_strided_slice %57 {offsets = [0, 0], sizes = [8, 256], strides = [1, 1]} : vector<8x512xf32> to vector<8x256xf32>
    %61 = tpu.concatenate %59, %60 in 0 : vector<4x256xf32>, vector<8x256xf32> -> vector<12x256xf32>
    %c0_11 = arith.constant 0 : index
    %c0_12 = arith.constant 0 : index
    %c0_13 = arith.constant 0 : index
    %62 = vector.load %arg5[%c0_11, %c0_12, %c0_13] : memref<2x12x256xf32, #tpu.memory_space<vmem>>, vector<1x12x256xf32>
    %63 = vector.shape_cast %62 : vector<1x12x256xf32> to vector<12x256xf32>
    %64 = vector.shape_cast %61 : vector<12x256xf32> to vector<1x12x256xf32>
    tpu.vector_store %arg5[%c0_11, %c0_12, %c0_13], %64 {strides = array<i32>} : memref<2x12x256xf32, #tpu.memory_space<vmem>>, vector<1x12x256xf32>,
    %65 = vector.extract_strided_slice %0 {offsets = [1, 0, 0], sizes = [1, 4, 256], strides = [1, 1, 1]} : vector<2x4x256xf32> to vector<1x4x256xf32>
    %66 = vector.shape_cast %65 : vector<1x4x256xf32> to vector<4x256xf32>
    %67 = vector.extract_strided_slice %57 {offsets = [0, 256], sizes = [8, 256], strides = [1, 1]} : vector<8x512xf32> to vector<8x256xf32>
    %68 = tpu.concatenate %66, %67 in 0 : vector<4x256xf32>, vector<8x256xf32> -> vector<12x256xf32>
    %c1 = arith.constant 1 : index
    %c0_14 = arith.constant 0 : index
    %c0_15 = arith.constant 0 : index
    %69 = vector.load %arg5[%c1, %c0_14, %c0_15] : memref<2x12x256xf32, #tpu.memory_space<vmem>>, vector<1x12x256xf32>
    %70 = vector.shape_cast %69 : vector<1x12x256xf32> to vector<12x256xf32>
    %71 = vector.shape_cast %68 : vector<12x256xf32> to vector<1x12x256xf32>
    tpu.vector_store %arg5[%c1, %c0_14, %c0_15], %71 {strides = array<i32>} : memref<2x12x256xf32, #tpu.memory_space<vmem>>, vector<1x12x256xf32>,
    return
  }
}

</mosaic_0001>

<llo_original>
// kernel: dense_block_rdn.1
$region0: #{dense_block_rdn.1}
  #allocation0 [shape = 'u32[]', space=smem, size = 0x4, offset = 0x4, fixed_abs, tag = 'smem constant byte address 0x4 - core index']
  #allocation1 [shape = 'u32[144,128]{1,0:T(1,128)}', space=vmem, size = 0x12000, scoped, tag = 'internal scratch']
  #allocation2 [shape = 'f32[1]{0:T(128)S(6)}', space=smem, size = 0x200, scoped, tag = 'scoped memory for dense_block_rdn.1']
  %s0 = inlined_call_operand.vmem [shape: f32[2,4,256], index: 0, kind: input, shape index: {}]
  %s1 = inlined_call_operand.vmem [shape: bf16[8,36], index: 1, kind: input, shape index: {}]
  %s2 = inlined_call_operand.vmem [shape: f32[9,512], index: 2, kind: input, shape index: {}]
  %s3 = inlined_call_operand.vmem [shape: f32[8,1], index: 3, kind: input, shape index: {}]
  %s4 = inlined_call_operand.<no memory space> [shape: f32[1], index: 4, kind: input, shape index: {}]
  %s5 = inlined_call_operand.vmem [shape: f32[2,12,256], index: 5, kind: output, shape index: {}]
  %s6 = sld [smem:[#allocation0]]
  $region30: #{dense_block_rdn.1} parent=0
    _
  %s8 = ssub.s32 1, %s6
  %s9 = scalar_select 0, %s8, %s6
  %10 = sst [smem:[#allocation2]] %s4
  // Predicated region
  $region2: #{dense_block_rdn.1} parent=0 // pred_check
    _
  $region3: #{dense_block_rdn.1} parent=0 // pred_check_branch
    %12 = sbr.rel (0) target = $region5
  $region4: #{dense_block_rdn.1} parent=0 // pred_region
    _
  $region5: #{dense_block_rdn.1} parent=0 // pred_fallthru
    _
  // Predicated region
  $region6: #{dense_block_rdn.1} parent=0 // pred_check
    _
  $region7: #{dense_block_rdn.1} parent=0 // pred_check_branch
    %14 = sbr.rel (0) target = $region9
  $region8: #{dense_block_rdn.1} parent=0 // pred_region
    _
  $region9: #{dense_block_rdn.1} parent=0 // pred_fallthru
    _
  // Predicated region
  $region10: #{dense_block_rdn.1} parent=0 // pred_check
    _
  $region11: #{dense_block_rdn.1} parent=0 // pred_check_branch
    %16 = sbr.rel (0) target = $region13
  $region12: #{dense_block_rdn.1} parent=0 // pred_region
    _
  $region13: #{dense_block_rdn.1} parent=0 // pred_fallthru
    _
  // Predicated region
  $region14: #{dense_block_rdn.1} parent=0 // pred_check
    _
  $region15: #{dense_block_rdn.1} parent=0 // pred_check_branch
    %18 = sbr.rel (0) target = $region17
  $region16: #{dense_block_rdn.1} parent=0 // pred_region
    _
  $region17: #{dense_block_rdn.1} parent=0 // pred_fallthru
    _
  // Predicated region
  $region18: #{dense_block_rdn.1} parent=0 // pred_check
    _
  $region19: #{dense_block_rdn.1} parent=0 // pred_check_branch
    %20 = sbr.rel (0) target = $region21
  $region20: #{dense_block_rdn.1} parent=0 // pred_region
    _
  $region21: #{dense_block_rdn.1} parent=0 // pred_fallthru
    _
  %v22 = vld [vmem:[%s0] sm:$0xff]
  %v23 = vld [vmem:[%s0 + $0x8] sm:$0xff]
  %v25 = vcombine.high %v22, %v22
  %v27 = vcombine.high %v23, %v23
  %28 = vrot.lane.b32.xlu0 %v22, 17
  %v29 = vpop.permute.xlu0 %28
  %30 = vrot.lane.b32.xlu0 %v25, 17
  %v31 = vpop.permute.xlu0 %30
  %32 = vrot.lane.b32.xlu0 %v23, 17
  %v33 = vpop.permute.xlu0 %32
  %34 = vrot.lane.b32.xlu0 %v27, 17
  %v35 = vpop.permute.xlu0 %34
  %vm36 = vcmask 138240
  %v37 = vsel %vm36, %v29, %v31
  %v38 = vsel %vm36, %v31, %v33
  %v39 = vsel %vm36, %v33, %v35
  %v45 = vsel %vm36, 0.0, %v29
  %v46 = vsel %vm36, %v35, 0.0
  %v47 = vld [vmem:[%s2] sm:$0xff]
  %v48 = vld [vmem:[%s2 + $0x8] sm:$0xff]
  %v49 = vld [vmem:[%s2 + $0x10] sm:$0xff]
  %v50 = vld [vmem:[%s2 + $0x18] sm:$0xff]
  %v51 = vld [vmem:[%s2 + $0x20] sm:$0x1]
  %v52 = vld [vmem:[%s2 + $0x28] sm:$0x1]
  %v53 = vld [vmem:[%s2 + $0x30] sm:$0x1]
  %v54 = vld [vmem:[%s2 + $0x38] sm:$0x1]
  %v55 = vlaneseq
  %v56 = vshrl.u32 %v55, 7
  %v57 = vsub.s32 0, %v56
  %v58 = vrot.slane %v47, %v57
  %v59 = vlaneseq
  %v60 = vshrl.u32 %v59, 7
  %v61 = vsub.s32 0, %v60
  %v62 = vrot.slane %v48, %v61
  %v63 = vlaneseq
  %v64 = vshrl.u32 %v63, 7
  %v65 = vsub.s32 0, %v64
  %v66 = vrot.slane %v49, %v65
  %v67 = vlaneseq
  %v68 = vshrl.u32 %v67, 7
  %v69 = vsub.s32 0, %v68
  %v70 = vrot.slane %v50, %v69
  %v71 = vmul.f32 %v45, %v58
  %v72 = vmul.f32 %v37, %v62
  %v73 = vmul.f32 %v38, %v66
  %v74 = vmul.f32 %v39, %v70
  %v75 = vlaneseq
  %v76 = vshrl.u32 %v75, 7
  %v77 = vsub.s32 1, %v76
  %v78 = vrot.slane %v47, %v77
  %v79 = vlaneseq
  %v80 = vshrl.u32 %v79, 7
  %v81 = vsub.s32 1, %v80
  %v82 = vrot.slane %v48, %v81
  %v83 = vlaneseq
  %v84 = vshrl.u32 %v83, 7
  %v85 = vsub.s32 1, %v84
  %v86 = vrot.slane %v49, %v85
  %v87 = vlaneseq
  %v88 = vshrl.u32 %v87, 7
  %v89 = vsub.s32 1, %v88
  %v90 = vrot.slane %v50, %v89
  %95 = vrot.lane.b32.xlu0 %v78, 1
  %v96 = vpop.permute.xlu0 %95
  %97 = vrot.lane.b32.xlu0 %v82, 1
  %v98 = vpop.permute.xlu0 %97
  %99 = vrot.lane.b32.xlu0 %v86, 1
  %v100 = vpop.permute.xlu0 %99
  %101 = vrot.lane.b32.xlu0 %v90, 1
  %v102 = vpop.permute.xlu0 %101
  %vm103 = vcmask 7168
  %v104 = vsel %vm103, %v96, %v98
  %v105 = vsel %vm103, %v98, %v100
  %v106 = vsel %vm103, %v100, %v102
  %v112 = vmul.f32 %v45, %v96
  %v113 = vmul.f32 %v37, %v104
  %v114 = vmul.f32 %v38, %v105
  %v115 = vmul.f32 %v39, %v106
  %v116 = vmul.f32 %v46, %v102
  %v117 = vlaneseq
  %v118 = vshrl.u32 %v117, 7
  %v119 = vsub.s32 2, %v118
  %v120 = vrot.slane %v47, %v119
  %v121 = vlaneseq
  %v122 = vshrl.u32 %v121, 7
  %v123 = vsub.s32 2, %v122
  %v124 = vrot.slane %v48, %v123
  %v125 = vlaneseq
  %v126 = vshrl.u32 %v125, 7
  %v127 = vsub.s32 2, %v126
  %v128 = vrot.slane %v49, %v127
  %v129 = vlaneseq
  %v130 = vshrl.u32 %v129, 7
  %v131 = vsub.s32 2, %v130
  %v132 = vrot.slane %v50, %v131
  %137 = vrot.lane.b32.xlu0 %v120, 2
  %v138 = vpop.permute.xlu0 %137
  %139 = vrot.lane.b32.xlu0 %v124, 2
  %v140 = vpop.permute.xlu0 %139
  %141 = vrot.lane.b32.xlu0 %v128, 2
  %v142 = vpop.permute.xlu0 %141
  %143 = vrot.lane.b32.xlu0 %v132, 2
  %v144 = vpop.permute.xlu0 %143
  %vm145 = vcmask 15360
  %v146 = vsel %vm145, %v138, %v140
  %v147 = vsel %vm145, %v140, %v142
  %v148 = vsel %vm145, %v142, %v144
  %v154 = vmul.f32 %v45, %v138
  %v155 = vmul.f32 %v37, %v146
  %v156 = vmul.f32 %v38, %v147
  %v157 = vmul.f32 %v39, %v148
  %v158 = vmul.f32 %v46, %v144
  %v159 = vlaneseq
  %v160 = vshrl.u32 %v159, 7
  %v161 = vsub.s32 3, %v160
  %v162 = vrot.slane %v47, %v161
  %v163 = vlaneseq
  %v164 = vshrl.u32 %v163, 7
  %v165 = vsub.s32 3, %v164
  %v166 = vrot.slane %v48, %v165
  %v167 = vlaneseq
  %v168 = vshrl.u32 %v167, 7
  %v169 = vsub.s32 3, %v168
  %v170 = vrot.slane %v49, %v169
  %v171 = vlaneseq
  %v172 = vshrl.u32 %v171, 7
  %v173 = vsub.s32 3, %v172
  %v174 = vrot.slane %v50, %v173
  %179 = vrot.lane.b32.xlu0 %v162, 16
  %v180 = vpop.permute.xlu0 %179
  %181 = vrot.lane.b32.xlu0 %v166, 16
  %v182 = vpop.permute.xlu0 %181
  %183 = vrot.lane.b32.xlu0 %v170, 16
  %v184 = vpop.permute.xlu0 %183
  %185 = vrot.lane.b32.xlu0 %v174, 16
  %v186 = vpop.permute.xlu0 %185
  %vm187 = vcmask 130048
  %v188 = vsel %vm187, %v180, %v182
  %v189 = vsel %vm187, %v182, %v184
  %v190 = vsel %vm187, %v184, %v186
  %v196 = vmul.f32 %v45, %v180
  %v197 = vmul.f32 %v37, %v188
  %v198 = vmul.f32 %v38, %v189
  %v199 = vmul.f32 %v39, %v190
  %v200 = vmul.f32 %v46, %v186
  %v201 = vlaneseq
  %v202 = vshrl.u32 %v201, 7
  %v203 = vsub.s32 4, %v202
  %v204 = vrot.slane %v47, %v203
  %v205 = vlaneseq
  %v206 = vshrl.u32 %v205, 7
  %v207 = vsub.s32 4, %v206
  %v208 = vrot.slane %v48, %v207
  %v209 = vlaneseq
  %v210 = vshrl.u32 %v209, 7
  %v211 = vsub.s32 4, %v210
  %v212 = vrot.slane %v49, %v211
  %v213 = vlaneseq
  %v214 = vshrl.u32 %v213, 7
  %v215 = vsub.s32 4, %v214
  %v216 = vrot.slane %v50, %v215
  %221 = vrot.lane.b32.xlu0 %v204, 17
  %v222 = vpop.permute.xlu0 %221
  %223 = vrot.lane.b32.xlu0 %v208, 17
  %v224 = vpop.permute.xlu0 %223
  %225 = vrot.lane.b32.xlu0 %v212, 17
  %v226 = vpop.permute.xlu0 %225
  %227 = vrot.lane.b32.xlu0 %v216, 17
  %v228 = vpop.permute.xlu0 %227
  %v229 = vsel %vm36, %v222, %v224
  %v230 = vsel %vm36, %v224, %v226
  %v231 = vsel %vm36, %v226, %v228
  %v237 = vmul.f32 %v45, %v222
  %v238 = vmul.f32 %v37, %v229
  %v239 = vmul.f32 %v38, %v230
  %v240 = vmul.f32 %v39, %v231
  %v241 = vmul.f32 %v46, %v228
  %v242 = vlaneseq
  %v243 = vshrl.u32 %v242, 7
  %v244 = vsub.s32 5, %v243
  %v245 = vrot.slane %v47, %v244
  %v246 = vlaneseq
  %v247 = vshrl.u32 %v246, 7
  %v248 = vsub.s32 5, %v247
  %v249 = vrot.slane %v48, %v248
  %v250 = vlaneseq
  %v251 = vshrl.u32 %v250, 7
  %v252 = vsub.s32 5, %v251
  %v253 = vrot.slane %v49, %v252
  %v254 = vlaneseq
  %v255 = vshrl.u32 %v254, 7
  %v256 = vsub.s32 5, %v255
  %v257 = vrot.slane %v50, %v256
  %262 = vrot.lane.b32.xlu0 %v245, 18
  %v263 = vpop.permute.xlu0 %262
  %264 = vrot.lane.b32.xlu0 %v249, 18
  %v265 = vpop.permute.xlu0 %264
  %266 = vrot.lane.b32.xlu0 %v253, 18
  %v267 = vpop.permute.xlu0 %266
  %268 = vrot.lane.b32.xlu0 %v257, 18
  %v269 = vpop.permute.xlu0 %268
  %vm270 = vcmask 146432
  %v271 = vsel %vm270, %v263, %v265
  %v272 = vsel %vm270, %v265, %v267
  %v273 = vsel %vm270, %v267, %v269
  %v279 = vmul.f32 %v45, %v263
  %v280 = vmul.f32 %v37, %v271
  %v281 = vmul.f32 %v38, %v272
  %v282 = vmul.f32 %v39, %v273
  %v283 = vmul.f32 %v46, %v269
  %v284 = vlaneseq
  %v285 = vshrl.u32 %v284, 7
  %v286 = vsub.s32 6, %v285
  %v287 = vrot.slane %v47, %v286
  %v288 = vlaneseq
  %v289 = vshrl.u32 %v288, 7
  %v290 = vsub.s32 6, %v289
  %v291 = vrot.slane %v48, %v290
  %v292 = vlaneseq
  %v293 = vshrl.u32 %v292, 7
  %v294 = vsub.s32 6, %v293
  %v295 = vrot.slane %v49, %v294
  %v296 = vlaneseq
  %v297 = vshrl.u32 %v296, 7
  %v298 = vsub.s32 6, %v297
  %v299 = vrot.slane %v50, %v298
  %304 = vrot.lane.b32.xlu0 %v287, 32
  %v305 = vpop.permute.xlu0 %304
  %306 = vrot.lane.b32.xlu0 %v291, 32
  %v307 = vpop.permute.xlu0 %306
  %308 = vrot.lane.b32.xlu0 %v295, 32
  %v309 = vpop.permute.xlu0 %308
  %310 = vrot.lane.b32.xlu0 %v299, 32
  %v311 = vpop.permute.xlu0 %310
  %vm312 = vcmask 261120
  %v313 = vsel %vm312, %v305, %v307
  %v314 = vsel %vm312, %v307, %v309
  %v315 = vsel %vm312, %v309, %v311
  %v321 = vmul.f32 %v45, %v305
  %v322 = vmul.f32 %v37, %v313
  %v323 = vmul.f32 %v38, %v314
  %v324 = vmul.f32 %v39, %v315
  %v325 = vmul.f32 %v46, %v311
  %v326 = vlaneseq
  %v327 = vshrl.u32 %v326, 7
  %v328 = vsub.s32 7, %v327
  %v329 = vrot.slane %v47, %v328
  %v330 = vlaneseq
  %v331 = vshrl.u32 %v330, 7
  %v332 = vsub.s32 7, %v331
  %v333 = vrot.slane %v48, %v332
  %v334 = vlaneseq
  %v335 = vshrl.u32 %v334, 7
  %v336 = vsub.s32 7, %v335
  %v337 = vrot.slane %v49, %v336
  %v338 = vlaneseq
  %v339 = vshrl.u32 %v338, 7
  %v340 = vsub.s32 7, %v339
  %v341 = vrot.slane %v50, %v340
  %346 = vrot.lane.b32.xlu0 %v329, 33
  %v347 = vpop.permute.xlu0 %346
  %348 = vrot.lane.b32.xlu0 %v333, 33
  %v349 = vpop.permute.xlu0 %348
  %350 = vrot.lane.b32.xlu0 %v337, 33
  %v351 = vpop.permute.xlu0 %350
  %352 = vrot.lane.b32.xlu0 %v341, 33
  %v353 = vpop.permute.xlu0 %352
  %vm354 = vcmask 269312
  %v355 = vsel %vm354, %v347, %v349
  %v356 = vsel %vm354, %v349, %v351
  %v357 = vsel %vm354, %v351, %v353
  %v363 = vmul.f32 %v45, %v347
  %v364 = vmul.f32 %v37, %v355
  %v365 = vmul.f32 %v38, %v356
  %v366 = vmul.f32 %v39, %v357
  %v367 = vmul.f32 %v46, %v353
  %v368 = vlaneseq
  %v369 = vshrl.u32 %v368, 7
  %v370 = vsub.s32 0, %v369
  %v371 = vrot.slane %v51, %v370
  %v372 = vlaneseq
  %v373 = vshrl.u32 %v372, 7
  %v374 = vsub.s32 0, %v373
  %v375 = vrot.slane %v52, %v374
  %v376 = vlaneseq
  %v377 = vshrl.u32 %v376, 7
  %v378 = vsub.s32 0, %v377
  %v379 = vrot.slane %v53, %v378
  %v380 = vlaneseq
  %v381 = vshrl.u32 %v380, 7
  %v382 = vsub.s32 0, %v381
  %v383 = vrot.slane %v54, %v382
  %388 = vrot.lane.b32.xlu0 %v371, 34
  %v389 = vpop.permute.xlu0 %388
  %390 = vrot.lane.b32.xlu0 %v375, 34
  %v391 = vpop.permute.xlu0 %390
  %392 = vrot.lane.b32.xlu0 %v379, 34
  %v393 = vpop.permute.xlu0 %392
  %394 = vrot.lane.b32.xlu0 %v383, 34
  %v395 = vpop.permute.xlu0 %394
  %vm396 = vcmask 277504
  %v397 = vsel %vm396, %v389, %v391
  %v398 = vsel %vm396, %v391, %v393
  %v399 = vsel %vm396, %v393, %v395
  %v405 = vmul.f32 %v45, %v389
  %v406 = vmul.f32 %v37, %v397
  %v407 = vmul.f32 %v38, %v398
  %v408 = vmul.f32 %v39, %v399
  %v409 = vmul.f32 %v46, %v395
  %v415 = vrot.slane %v112, 4
  %v416 = vrot.slane %v113, 4
  %v417 = vrot.slane %v114, 4
  %v418 = vrot.slane %v115, 4
  %v419 = vrot.slane %v116, 4
  %420 = vrot.lane.b32.xlu0 %v415, 127
  %v421 = vpop.permute.xlu0 %420
  %422 = vrot.lane.b32.xlu0 %v416, 127
  %v423 = vpop.permute.xlu0 %422
  %424 = vrot.lane.b32.xlu0 %v417, 127
  %v425 = vpop.permute.xlu0 %424
  %426 = vrot.lane.b32.xlu0 %v418, 127
  %v427 = vpop.permute.xlu0 %426
  %428 = vrot.lane.b32.xlu0 %v419, 127
  %v429 = vpop.permute.xlu0 %428
  %vm430 = vcmask 1039360
  %v431 = vsel %vm430, %v421, %v423
  %v432 = vsel %vm430, %v423, %v425
  %v433 = vsel %vm430, %v425, %v427
  %v434 = vsel %vm430, %v427, %v429
  %444 = vrot.lane.b32.xlu0 %v154, 126
  %v445 = vpop.permute.xlu0 %444
  %446 = vrot.lane.b32.xlu0 %v155, 126
  %v447 = vpop.permute.xlu0 %446
  %448 = vrot.lane.b32.xlu0 %v156, 126
  %v449 = vpop.permute.xlu0 %448
  %450 = vrot.lane.b32.xlu0 %v157, 126
  %v451 = vpop.permute.xlu0 %450
  %452 = vrot.lane.b32.xlu0 %v158, 126
  %v453 = vpop.permute.xlu0 %452
  %vm454 = vcmask 1031168
  %v455 = vsel %vm454, %v445, %v447
  %v456 = vsel %vm454, %v447, %v449
  %v457 = vsel %vm454, %v449, %v451
  %v458 = vsel %vm454, %v451, %v453
  %v468 = vrot.slane %v196, 4
  %v469 = vrot.slane %v197, 4
  %v470 = vrot.slane %v198, 4
  %v471 = vrot.slane %v199, 4
  %v472 = vrot.slane %v200, 4
  %473 = vrot.lane.b32.xlu0 %v468, 112
  %v474 = vpop.permute.xlu0 %473
  %475 = vrot.lane.b32.xlu0 %v469, 112
  %v476 = vpop.permute.xlu0 %475
  %477 = vrot.lane.b32.xlu0 %v470, 112
  %v478 = vpop.permute.xlu0 %477
  %479 = vrot.lane.b32.xlu0 %v471, 112
  %v480 = vpop.permute.xlu0 %479
  %481 = vrot.lane.b32.xlu0 %v472, 112
  %v482 = vpop.permute.xlu0 %481
  %vm483 = vcmask 916480
  %v484 = vsel %vm483, %v474, %v476
  %v485 = vsel %vm483, %v476, %v478
  %v486 = vsel %vm483, %v478, %v480
  %v487 = vsel %vm483, %v480, %v482
  %497 = vrot.lane.b32.xlu0 %v237, 111
  %v498 = vpop.permute.xlu0 %497
  %499 = vrot.lane.b32.xlu0 %v238, 111
  %v500 = vpop.permute.xlu0 %499
  %501 = vrot.lane.b32.xlu0 %v239, 111
  %v502 = vpop.permute.xlu0 %501
  %503 = vrot.lane.b32.xlu0 %v240, 111
  %v504 = vpop.permute.xlu0 %503
  %505 = vrot.lane.b32.xlu0 %v241, 111
  %v506 = vpop.permute.xlu0 %505
  %vm507 = vcmask 908288
  %v508 = vsel %vm507, %v498, %v500
  %v509 = vsel %vm507, %v500, %v502
  %v510 = vsel %vm507, %v502, %v504
  %v511 = vsel %vm507, %v504, %v506
  %v521 = vrot.slane %v279, 4
  %v522 = vrot.slane %v280, 4
  %v523 = vrot.slane %v281, 4
  %v524 = vrot.slane %v282, 4
  %v525 = vrot.slane %v283, 4
  %526 = vrot.lane.b32.xlu0 %v521, 110
  %v527 = vpop.permute.xlu0 %526
  %528 = vrot.lane.b32.xlu0 %v522, 110
  %v529 = vpop.permute.xlu0 %528
  %530 = vrot.lane.b32.xlu0 %v523, 110
  %v531 = vpop.permute.xlu0 %530
  %532 = vrot.lane.b32.xlu0 %v524, 110
  %v533 = vpop.permute.xlu0 %532
  %534 = vrot.lane.b32.xlu0 %v525, 110
  %v535 = vpop.permute.xlu0 %534
  %vm536 = vcmask 900096
  %v537 = vsel %vm536, %v527, %v529
  %v538 = vsel %vm536, %v529, %v531
  %v539 = vsel %vm536, %v531, %v533
  %v540 = vsel %vm536, %v533, %v535
  %550 = vrot.lane.b32.xlu0 %v321, 96
  %v551 = vpop.permute.xlu0 %550
  %552 = vrot.lane.b32.xlu0 %v322, 96
  %v553 = vpop.permute.xlu0 %552
  %554 = vrot.lane.b32.xlu0 %v323, 96
  %v555 = vpop.permute.xlu0 %554
  %556 = vrot.lane.b32.xlu0 %v324, 96
  %v557 = vpop.permute.xlu0 %556
  %558 = vrot.lane.b32.xlu0 %v325, 96
  %v559 = vpop.permute.xlu0 %558
  %vm560 = vcmask 785408
  %v561 = vsel %vm560, %v551, %v553
  %v562 = vsel %vm560, %v553, %v555
  %v563 = vsel %vm560, %v555, %v557
  %v564 = vsel %vm560, %v557, %v559
  %v574 = vrot.slane %v363, 4
  %v575 = vrot.slane %v364, 4
  %v576 = vrot.slane %v365, 4
  %v577 = vrot.slane %v366, 4
  %v578 = vrot.slane %v367, 4
  %579 = vrot.lane.b32.xlu0 %v574, 95
  %v580 = vpop.permute.xlu0 %579
  %581 = vrot.lane.b32.xlu0 %v575, 95
  %v582 = vpop.permute.xlu0 %581
  %583 = vrot.lane.b32.xlu0 %v576, 95
  %v584 = vpop.permute.xlu0 %583
  %585 = vrot.lane.b32.xlu0 %v577, 95
  %v586 = vpop.permute.xlu0 %585
  %587 = vrot.lane.b32.xlu0 %v578, 95
  %v588 = vpop.permute.xlu0 %587
  %vm589 = vcmask 777216
  %v590 = vsel %vm589, %v580, %v582
  %v591 = vsel %vm589, %v582, %v584
  %v592 = vsel %vm589, %v584, %v586
  %v593 = vsel %vm589, %v586, %v588
  %603 = vrot.lane.b32.xlu0 %v405, 94
  %v604 = vpop.permute.xlu0 %603
  %605 = vrot.lane.b32.xlu0 %v406, 94
  %v606 = vpop.permute.xlu0 %605
  %607 = vrot.lane.b32.xlu0 %v407, 94
  %v608 = vpop.permute.xlu0 %607
  %609 = vrot.lane.b32.xlu0 %v408, 94
  %v610 = vpop.permute.xlu0 %609
  %611 = vrot.lane.b32.xlu0 %v409, 94
  %v612 = vpop.permute.xlu0 %611
  %vm613 = vcmask 769024
  %v614 = vsel %vm613, %v604, %v606
  %v615 = vsel %vm613, %v606, %v608
  %v616 = vsel %vm613, %v608, %v610
  %v617 = vsel %vm613, %v610, %v612
  %vm622 = vcmask 1043456
  %v623 = vsel %vm622, %v71, %v431
  %v624 = vsel %vm622, %v72, %v432
  %v625 = vsel %vm622, %v73, %v433
  %v626 = vsel %vm622, %v74, %v434
  %v627 = vsel %vm622, %v455, %v484
  %v628 = vsel %vm622, %v456, %v485
  %v629 = vsel %vm622, %v457, %v486
  %v630 = vsel %vm622, %v458, %v487
  %v631 = vsel %vm622, %v508, %v537
  %v632 = vsel %vm622, %v509, %v538
  %v633 = vsel %vm622, %v510, %v539
  %v634 = vsel %vm622, %v511, %v540
  %v635 = vsel %vm622, %v561, %v590
  %v636 = vsel %vm622, %v562, %v591
  %v637 = vsel %vm622, %v563, %v592
  %v638 = vsel %vm622, %v564, %v593
  %v639 = vld [vmem:[%s1] sm:$0xf]
  %v640 = vpack.c.bf16 %v627, %v623
  %v641 = vpack.c.bf16 %v628, %v624
  %v642 = vpack.c.bf16 %v629, %v625
  %v643 = vpack.c.bf16 %v630, %v626
  %v644 = vpack.c.bf16 %v635, %v631
  %v645 = vpack.c.bf16 %v636, %v632
  %v646 = vpack.c.bf16 %v637, %v633
  %v647 = vpack.c.bf16 %v638, %v634
  %v648 = vpack.c.bf16 %v614, %v614
  %v649 = vpack.c.bf16 %v615, %v615
  %v650 = vpack.c.bf16 %v616, %v616
  %v651 = vpack.c.bf16 %v617, %v617
  %v652 = vld [vmem:[%s3] sm:$0xff]
  %654 = vset.pattern.permute.xlu0 0
  %655 = vperm.xlu0 %654, %v652
  %v656 = vpop.permute.xlu0 %655
  %vm658 = vcmask 293888
  %v660 = vsel %vm658, %v639, 0
  %vm662 = vcmask 1041408
  %v664 = vsel %vm662, %v648, 0
  %v667 = vsel %vm662, %v649, 0
  %v670 = vsel %vm662, %v650, 0
  %v673 = vsel %vm662, %v651, 0
  %675 = vmatprep.subr.bf16.mxu0 0
  %676 = vmatpush1.bf16.msra.mxu0 0
  %677 = vmatprep.subr.bf16.mxu0 0
  %678 = vmatpush1.bf16.msra.mxu0 0
  %679 = vmatprep.subr.bf16.mxu0 0
  %680 = vmatpush1.bf16.msra.mxu0 0
  %681 = vmatprep.subr.bf16.mxu0 0
  %682 = vmatpush1.bf16.msra.mxu0 0
  %683 = vmatprep.subr.bf16.mxu0 0
  %684 = vmatpush1.bf16.msra.mxu0 0
  %685 = vmatprep.subr.bf16.mxu0 %v667
  %686 = vmatpush1.bf16.msra.mxu0 %v664
  %687 = vmatprep.subr.bf16.mxu0 %v645
  %688 = vmatpush1.bf16.msra.mxu0 %v644
  %689 = vmatprep.subr.bf16.mxu0 %v641
  %690 = vmatpush1.bf16.msra.mxu0 %v640
  %691 = vmatprep.subr.bf16.mxu0 0
  %692 = vmatpush2.bf16.msra.mxu0 0
  %693 = vmatprep.subr.bf16.mxu0 0
  %694 = vmatpush2.bf16.msra.mxu0 0
  %695 = vmatprep.subr.bf16.mxu0 0
  %696 = vmatpush2.bf16.msra.mxu0 0
  %697 = vmatprep.subr.bf16.mxu0 0
  %698 = vmatpush2.bf16.msra.mxu0 0
  %699 = vmatprep.subr.bf16.mxu0 0
  %700 = vmatpush2.bf16.msra.mxu0 0
  %701 = vmatprep.subr.bf16.mxu0 0
  %702 = vmatpush2.bf16.msra.mxu0 0
  %703 = vmatprep.subr.bf16.mxu0 0
  %704 = vmatpush2.bf16.msra.mxu0 0
  %705 = vmatprep.subr.bf16.mxu0 0
  %706 = vmatpush2.bf16.msra.mxu0 0
  %707 = vmatprep.mubr.bf16.mxu0 0
  %708 = vmatmul.mubr.bf16.gmra.mxu0 %v660
  %v709 = vpop.f32.mrf.mxu0
  %v710 = vadd.f32 %v656, %v709
  %v711 = vpop.f32.mrf.mxu0
  %v712 = vadd.f32 %v656, %v711
  %v713 = vpop.f32.mrf.mxu0
  %v714 = vpop.f32.mrf.mxu0
  %715 = vdwg.mxu0
  %716 = vmatprep.subr.bf16.mxu0 0
  %717 = vmatpush1.bf16.msra.mxu0 0
  %718 = vmatprep.subr.bf16.mxu0 0
  %719 = vmatpush1.bf16.msra.mxu0 0
  %720 = vmatprep.subr.bf16.mxu0 0
  %721 = vmatpush1.bf16.msra.mxu0 0
  %722 = vmatprep.subr.bf16.mxu0 0
  %723 = vmatpush1.bf16.msra.mxu0 0
  %724 = vmatprep.subr.bf16.mxu0 0
  %725 = vmatpush1.bf16.msra.mxu0 0
  %726 = vmatprep.subr.bf16.mxu0 %v673
  %727 = vmatpush1.bf16.msra.mxu0 %v670
  %728 = vmatprep.subr.bf16.mxu0 %v647
  %729 = vmatpush1.bf16.msra.mxu0 %v646
  %730 = vmatprep.subr.bf16.mxu0 %v643
  %731 = vmatpush1.bf16.msra.mxu0 %v642
  %732 = vmatprep.subr.bf16.mxu0 0
  %733 = vmatpush2.bf16.msra.mxu0 0
  %734 = vmatprep.subr.bf16.mxu0 0
  %735 = vmatpush2.bf16.msra.mxu0 0
  %736 = vmatprep.subr.bf16.mxu0 0
  %737 = vmatpush2.bf16.msra.mxu0 0
  %738 = vmatprep.subr.bf16.mxu0 0
  %739 = vmatpush2.bf16.msra.mxu0 0
  %740 = vmatprep.subr.bf16.mxu0 0
  %741 = vmatpush2.bf16.msra.mxu0 0
  %742 = vmatprep.subr.bf16.mxu0 0
  %743 = vmatpush2.bf16.msra.mxu0 0
  %744 = vmatprep.subr.bf16.mxu0 0
  %745 = vmatpush2.bf16.msra.mxu0 0
  %746 = vmatprep.subr.bf16.mxu0 0
  %747 = vmatpush2.bf16.msra.mxu0 0
  %748 = vmatprep.mubr.bf16.mxu0 0
  %749 = vmatmul.mubr.bf16.gmra.mxu0 %v660
  %v750 = vpop.f32.mrf.mxu0
  %v751 = vadd.f32 %v656, %v750
  %v752 = vpop.f32.mrf.mxu0
  %v753 = vadd.f32 %v656, %v752
  %v754 = vpop.f32.mrf.mxu0
  %v755 = vpop.f32.mrf.mxu0
  %756 = vdwg.mxu0
  %s757 = sld [smem:[#allocation2]]
  %vm758 = vcmp.gt.f32.partialorder %v710, 0.0
  %vm759 = vcmp.gt.f32.partialorder %v712, 0.0
  %vm760 = vcmp.gt.f32.partialorder %v751, 0.0
  %vm761 = vcmp.gt.f32.partialorder %v753, 0.0
  %v762 = vstv %s757
  %v763 = vmul.f32 %v762, %v710
  %v764 = vmul.f32 %v762, %v712
  %v765 = vmul.f32 %v762, %v751
  %v766 = vmul.f32 %v762, %v753
  %v767 = vsel %vm758, %v710, %v763
  %v768 = vsel %vm759, %v712, %v764
  %v769 = vsel %vm760, %v751, %v765
  %v770 = vsel %vm761, %v753, %v766
  %v774 = vrot.slane %v767, 4
  %v775 = vrot.slane %v768, 4
  %v778 = vsel %vm622, %v22, %v774
  %v779 = vsel %vm622, %v25, %v775
  %780 = vst [vmem:[%s5] sm:$0xff] %v778
  %781 = vst [vmem:[%s5 + $0x8] sm:$0xff] %v779
  %782 = vst [vmem:[%s5 + $0x10] sm:$0xf] %v774
  %783 = vst [vmem:[%s5 + $0x18] sm:$0xf] %v775
  %v787 = vrot.slane %v769, 4
  %v788 = vrot.slane %v770, 4
  %v791 = vsel %vm622, %v23, %v787
  %v792 = vsel %vm622, %v27, %v788
  %s793 = scalar_lea.vmem %s5, 32
  %794 = vst [vmem:[%s793] sm:$0xff] %v791
  %795 = vst [vmem:[%s793 + $0x8] sm:$0xff] %v792
  %796 = vst [vmem:[%s793 + $0x10] sm:$0xf] %v787
  %797 = vst [vmem:[%s793 + $0x18] sm:$0xf] %v788
  // Predicated region
  $region22: #{dense_block_rdn.1} parent=0 // pred_check
    _
  $region23: #{dense_block_rdn.1} parent=0 // pred_check_branch
    %799 = sbr.rel (0) target = $region25
  $region24: #{dense_block_rdn.1} parent=0 // pred_region
    _
  $region25: #{dense_block_rdn.1} parent=0 // pred_fallthru
    _
  // Predicated region
  $region26: #{dense_block_rdn.1} parent=0 // pred_check
    _
  $region27: #{dense_block_rdn.1} parent=0 // pred_check_branch
    %801 = sbr.rel (0) target = $region29
  $region28: #{dense_block_rdn.1} parent=0 // pred_region
    _
  $region29: #{dense_block_rdn.1} parent=0 // pred_fallthru
    _

</llo_original>
